<compile_context>
chip_gen: v5e
topology: v5e:2x2
jax: 0.10.0
libtpu: 0.0.40
codegen_flags: <defaults>
</compile_context>

<pallas_src>
import functools

import jax
import jax.numpy as jnp
from jax.experimental import pallas as pl
from jax.experimental.pallas import tpu as pltpu

_LANES = 128
_SUB_ROWS = 512          # rows per in-kernel sub-tile (keeps VMEM temporaries small)
_PAD_LOGIT = -1.0e4      # sigmoid -> 0 exactly, BCE(_PAD_LOGIT, 0) -> 0 exactly
_SMOOTH = 1.0


def _ceil_div(a, b):
    return -(-a // b)


def _pick_rows_block(rows, max_rows):
    """Largest power-of-two row block (>= 8) that does not exceed rows or max_rows."""
    max_rows = max(8, max_rows)
    blk = 8
    while blk * 2 <= min(rows, max_rows):
        blk *= 2
    return blk


def _vreg_sum(v):
    """(r, 128) -> (8, 128) via pure vreg adds (no cross-lane/sublane movement)."""
    r = v.shape[0]
    return v.reshape(r // 8, 8, _LANES).sum(axis=0)


def _sigmoid_and_bce(x, t):
    """Shared exp(-|x|): 1 exp + 1 log + 1 approx-reciprocal per element."""
    e = jnp.exp(-jnp.abs(x))
    inv = pl.reciprocal(1.0 + e, approx=True)
    p = jnp.where(x >= 0.0, 1.0, e) * inv
    bce = jnp.maximum(x, 0.0) - x * t + jnp.log(1.0 + e)
    return p, bce


# ----------------------------------------------------------------------------
# Segmentation-loss kernel: accumulates BCE sum + per-(sample,chunk) dice partial
# sums into vreg-shaped (8, 128) accumulators.  Grid = (B * P, column-blocks).
# ----------------------------------------------------------------------------
def _seg_loss_kernel(x_ref, t_ref, bce_ref, inter_ref, psum_ref, tsum_ref,
                     *, blk, P, nj, rows, need_mask):
    j = pl.program_id(1)

    @pl.when(j == 0)
    def _():
        bce_ref[...] = jnp.zeros_like(bce_ref)
        inter_ref[...] = jnp.zeros_like(inter_ref)
        psum_ref[...] = jnp.zeros_like(psum_ref)
        tsum_ref[...] = jnp.zeros_like(tsum_ref)

    if need_mask:
        g = pl.program_id(0)
        chunk = (g % P) if P > 1 else 0
        # UNCLAMPED logical row offset of this block (the index_map clamps the DMA
        # block index; using the unclamped offset here masks duplicate/OOB rows).
        row0 = (chunk * nj + j) * blk

    sub = min(blk, _SUB_ROWS)
    s_bce = jnp.zeros((8, _LANES), jnp.float32)
    s_int = jnp.zeros((8, _LANES), jnp.float32)
    s_p = jnp.zeros((8, _LANES), jnp.float32)
    s_t = jnp.zeros((8, _LANES), jnp.float32)

    for i in range(blk // sub):                       # static unrolled sub-tile loop
        x = x_ref[0, i * sub:(i + 1) * sub, :].astype(jnp.float32)
        t = t_ref[0, i * sub:(i + 1) * sub, :].astype(jnp.float32)
        if need_mask:
            rid = row0 + i * sub + jax.lax.broadcasted_iota(jnp.int32, (sub, _LANES), 0)
            valid = rid < rows
            x = jnp.where(valid, x, _PAD_LOGIT)       # exact-zero contribution values
            t = jnp.where(valid, t, 0.0)
        p, bce = _sigmoid_and_bce(x, t)
        s_bce = s_bce + _vreg_sum(bce)
        s_int = s_int + _vreg_sum(p * t)
        s_p = s_p + _vreg_sum(p)
        s_t = s_t + _vreg_sum(t)

    bce_ref[...] += s_bce[None]
    inter_ref[...] += s_int[None]
    psum_ref[...] += s_p[None]
    tsum_ref[...] += s_t[None]


def _seg_loss_sums(x3, t3, *, rows, blk, P, nj, need_mask):
    B = x3.shape[0]
    nblk = _ceil_div(rows, blk)

    if P > 1:
        def in_map(g, j):
            return (g // P, jnp.minimum((g % P) * nj + j, nblk - 1), 0)
    else:
        def in_map(g, j):
            return (g, jnp.minimum(j, nblk - 1), 0)

    in_spec = pl.BlockSpec((1, blk, _LANES), in_map)
    acc_spec = pl.BlockSpec((1, 8, _LANES), lambda g, j: (g, 0, 0))
    acc_shape = jax.ShapeDtypeStruct((B * P, 8, _LANES), jnp.float32)

    kernel = functools.partial(_seg_loss_kernel, blk=blk, P=P, nj=nj,
                               rows=rows, need_mask=need_mask)

    n_elems = B * rows * _LANES
    cost = pl.CostEstimate(
        flops=14 * n_elems,
        transcendentals=3 * n_elems,
        bytes_accessed=(x3.size * x3.dtype.itemsize + t3.size * t3.dtype.itemsize
                        + 4 * B * P * 8 * _LANES * 4),
    )

    return pl.pallas_call(
        kernel,
        out_shape=(acc_shape, acc_shape, acc_shape, acc_shape),
        grid=(B * P, nj),
        in_specs=[in_spec, in_spec],
        out_specs=(acc_spec, acc_spec, acc_spec, acc_spec),
        compiler_params=pltpu.CompilerParams(
            dimension_semantics=("parallel", "arbitrary"),
            vmem_limit_bytes=32 * 1024 * 1024),
        cost_estimate=cost,
    )(x3, t3)


# ----------------------------------------------------------------------------
# Bilinear flow warp (grid_sample-style gather) — XLA glue.
# TODO(synk): data-dependent gather (grid_sample) has no clean Pallas TPU equivalent
#             here (a VMEM row-band gather kernel or one-hot MXU matmuls would be the
#             next step); border-clamp semantics (PyTorch grid_sample default is zeros).
# ----------------------------------------------------------------------------
def _bilinear_warp(img, flow):
    # img: (H, W), flow: (2, H, W) with flow[0] = dx (W axis), flow[1] = dy (H axis)
    H, W = img.shape
    flat = img.reshape(-1)
    ys = jax.lax.broadcasted_iota(jnp.float32, (H, W), 0)
    xs = jax.lax.broadcasted_iota(jnp.float32, (H, W), 1)
    xq = xs + flow[0]
    yq = ys + flow[1]
    x0 = jnp.floor(xq)
    y0 = jnp.floor(yq)
    wx = xq - x0
    wy = yq - y0

    def tap(yy, xx):
        yi = jnp.clip(yy, 0.0, H - 1).astype(jnp.int32)
        xi = jnp.clip(xx, 0.0, W - 1).astype(jnp.int32)
        return jnp.take(flat, yi * W + xi)

    return ((1.0 - wy) * (1.0 - wx) * tap(y0, x0)
            + (1.0 - wy) * wx * tap(y0, x0 + 1.0)
            + wy * (1.0 - wx) * tap(y0 + 1.0, x0)
            + wy * wx * tap(y0 + 1.0, x0 + 1.0))


# ----------------------------------------------------------------------------
# CombinedLoss.forward equivalent.
# ----------------------------------------------------------------------------
def combined_loss(outputs, targets, flows=None, *, ce_weight=1.0, dice_weight=1.0,
                  temporal_weight=1.0, max_block_rows=4096):
    logits = outputs.get("logits", outputs.get("pred_masks"))
    masks = targets["masks"]          # native dtype (f32 / bf16 / uint8); cast in-kernel
    B, T, H, W = logits.shape
    N = T * H * W

    # --- segmentation losses (BCE + Dice): one Pallas reduction kernel ------
    # Lane-dense (rows, 128) view; the reshape is free (row-major).  Pad copies only in
    # the rare lane-unaligned / tiny-volume cases, with exact-zero-contribution values.
    x2 = logits.reshape(B, N)
    t2 = masks.reshape(B, N)
    n_pad = (-N) % _LANES
    if n_pad:
        x2 = jnp.pad(x2, ((0, 0), (0, n_pad)), constant_values=_PAD_LOGIT)
        t2 = jnp.pad(t2, ((0, 0), (0, n_pad)), constant_values=0)
    rows = (N + n_pad) // _LANES
    x3 = x2.reshape(B, rows, _LANES)
    t3 = t2.reshape(B, rows, _LANES)
    if rows < 8:   # degenerate tiny volume: keep the block within the array extent
        x3 = jnp.pad(x3, ((0, 0), (0, 8 - rows), (0, 0)), constant_values=_PAD_LOGIT)
        t3 = jnp.pad(t3, ((0, 0), (0, 8 - rows), (0, 0)), constant_values=0)
        rows = 8

    blk = _pick_rows_block(rows, max_block_rows)
    nblk = _ceil_div(rows, blk)
    P = 2 if nblk >= 2 else 1     # >=2-wide parallel axis so v7x's 2nd TC participates
    nj = _ceil_div(nblk, P)
    need_mask = (P * nj * blk) != rows

    bce_a, int_a, p_a, t_a = _seg_loss_sums(
        x3, t3, rows=rows, blk=blk, P=P, nj=nj, need_mask=need_mask)

    def per_sample(acc):              # (B*P, 8, 128) -> (B,)
        return acc.reshape(B, P * 8 * _LANES).sum(axis=-1)

    ce_loss = ce_weight * (jnp.sum(bce_a) / (B * N))
    inter = per_sample(int_a)
    psum = per_sample(p_a)
    tsum = per_sample(t_a)
    dice = (2.0 * inter + _SMOOTH) / (psum + tsum + _SMOOTH)
    dice_loss = dice_weight * (1.0 - jnp.mean(dice))

    losses = {"ce_loss": ce_loss, "dice_loss": dice_loss}

    # --- temporal consistency loss (fused XLA warp + |diff| + mean) ---------
    if flows is not None:
        pred = outputs.get("pred_masks", outputs.get("logits")).astype(jnp.float32)
        probs_prev = jax.nn.sigmoid(pred[:, :-1])                        # (B, T-1, H, W)
        warped = jax.vmap(jax.vmap(_bilinear_warp))(probs_prev, flows.astype(jnp.float32))
        diff = jnp.abs(jax.nn.sigmoid(pred[:, 1:]) - warped)
        losses["temporal_loss"] = temporal_weight * jnp.mean(diff)

    losses["total_loss"] = sum(v for k, v in losses.items() if k != "total_loss")
    return losses


# ----------------------------------------------------------------------------
# Pure-JAX reference (for correctness checking only).
# ----------------------------------------------------------------------------
def _reference_losses(logits, masks, flows=None, ce_weight=1.0, dice_weight=1.0,
                      temporal_weight=1.0):
    x = logits.astype(jnp.float32)
    t = masks.astype(jnp.float32)
    B = x.shape[0]
    bce = jnp.maximum(x, 0.0) - x * t + jnp.log(1.0 + jnp.exp(-jnp.abs(x)))
    out = {"ce_loss": ce_weight * jnp.mean(bce)}
    p = jax.nn.sigmoid(x).reshape(B, -1)
    tf = t.reshape(B, -1)
    inter = jnp.sum(p * tf, axis=-1)
    dice = (2.0 * inter + _SMOOTH) / (jnp.sum(p, -1) + jnp.sum(tf, -1) + _SMOOTH)
    out["dice_loss"] = dice_weight * (1.0 - jnp.mean(dice))
    if flows is not None:
        probs_prev = jax.nn.sigmoid(x[:, :-1])
        warped = jax.vmap(jax.vmap(_bilinear_warp))(probs_prev, flows.astype(jnp.float32))
        out["temporal_loss"] = temporal_weight * jnp.mean(
            jnp.abs(jax.nn.sigmoid(x[:, 1:]) - warped))
    out["total_loss"] = sum(v for k, v in out.items() if k != "total_loss")
    return out


if __name__ == "__main__":
    key = jax.random.PRNGKey(0)
    B, T, H, W = 2, 4, 16, 16
    k1, k2, k3 = jax.random.split(key, 3)

    logits = jax.random.normal(k1, (B, T, H, W), dtype=jnp.float32)
    masks = (jax.random.uniform(k2, (B, T, H, W)) > 0.5).astype(jnp.float32)
    flows = 2.0 * jax.random.normal(k3, (B, T - 1, 2, H, W), dtype=jnp.float32)

    losses = combined_loss({"logits": logits}, {"masks": masks}, flows)
    losses = jax.tree_util.tree_map(jax.block_until_ready, losses)
    ref = _reference_losses(logits, masks, flows)
    for k in ("ce_loss", "dice_loss", "temporal_loss", "total_loss"):
        assert jnp.isfinite(losses[k])
        assert jnp.allclose(losses[k], ref[k], rtol=5e-3, atol=1e-4), (k, losses[k], ref[k])

    # Exercise the in-kernel tail mask, the 2-way chunk split and the clamped overhang
    # block on an odd-sized problem with a tiny forced block size.
    l2 = jax.random.normal(jax.random.PRNGKey(1), (1, 4, 40, 16), dtype=jnp.float32)
    m2 = (jax.random.uniform(jax.random.PRNGKey(2), (1, 4, 40, 16)) > 0.5).astype(jnp.float32)
    got = combined_loss({"logits": l2}, {"masks": m2}, None, max_block_rows=8)
    got = jax.tree_util.tree_map(jax.block_until_ready, got)
    want = _reference_losses(l2, m2, None)
    for k in ("ce_loss", "dice_loss", "total_loss"):
        assert jnp.allclose(got[k], want[k], rtol=5e-3, atol=1e-4), (k, got[k], want[k])

    print("KERNEL_OK")
</pallas_src>

<mosaic_0001>
module attributes {stable_mosaic.version = 11 : i64} {
  func.func @_seg_loss_kernel(%arg0: i32, %arg1: i32, %arg2: memref<1x8x128xf32, #tpu.memory_space<vmem>>, %arg3: memref<1x8x128xf32, #tpu.memory_space<vmem>>, %arg4: memref<1x8x128xf32, #tpu.memory_space<vmem>>, %arg5: memref<1x8x128xf32, #tpu.memory_space<vmem>>, %arg6: memref<1x8x128xf32, #tpu.memory_space<vmem>>, %arg7: memref<1x8x128xf32, #tpu.memory_space<vmem>>) attributes {dimension_semantics = [#tpu.dimension_semantics<parallel>, #tpu.dimension_semantics<arbitrary>], iteration_bounds = array<i64: 2, 1>, scalar_prefetch = 0 : i64, scratch_operands = 0 : i64, tpu.core_type = #tpu.core_type<tc>, window_params = [{transform_indices = @transform_0, window_bounds = array<i64: 1, 8, 128>}, {transform_indices = @transform_1, window_bounds = array<i64: 1, 8, 128>}, {transform_indices = @transform_2, window_bounds = array<i64: 1, 8, 128>}, {transform_indices = @transform_3, window_bounds = array<i64: 1, 8, 128>}, {transform_indices = @transform_4, window_bounds = array<i64: 1, 8, 128>}, {transform_indices = @transform_5, window_bounds = array<i64: 1, 8, 128>}]} {
    %c0_i32 = arith.constant 0 : i32
    %0 = arith.cmpi eq, %arg1, %c0_i32 : i32
    %1 = arith.extui %0 : i1 to i32
    %c0_i32_0 = arith.constant 0 : i32
    %2 = arith.cmpi ne, %1, %c0_i32_0 : i32
    scf.if %2 {
      %cst_43 = arith.constant 0.000000e+00 : f32
      %60 = vector.broadcast %cst_43 : f32 to vector<1x8x128xf32>
      %c0_44 = arith.constant 0 : index
      %c0_45 = arith.constant 0 : index
      %c0_46 = arith.constant 0 : index
      %61 = vector.load %arg4[%c0_44, %c0_45, %c0_46] : memref<1x8x128xf32, #tpu.memory_space<vmem>>, vector<1x8x128xf32>
      tpu.vector_store %arg4[%c0_44, %c0_45, %c0_46], %60 {strides = array<i32>} : memref<1x8x128xf32, #tpu.memory_space<vmem>>, vector<1x8x128xf32>,
      %cst_47 = arith.constant 0.000000e+00 : f32
      %62 = vector.broadcast %cst_47 : f32 to vector<1x8x128xf32>
      %c0_48 = arith.constant 0 : index
      %c0_49 = arith.constant 0 : index
      %c0_50 = arith.constant 0 : index
      %63 = vector.load %arg5[%c0_48, %c0_49, %c0_50] : memref<1x8x128xf32, #tpu.memory_space<vmem>>, vector<1x8x128xf32>
      tpu.vector_store %arg5[%c0_48, %c0_49, %c0_50], %62 {strides = array<i32>} : memref<1x8x128xf32, #tpu.memory_space<vmem>>, vector<1x8x128xf32>,
      %cst_51 = arith.constant 0.000000e+00 : f32
      %64 = vector.broadcast %cst_51 : f32 to vector<1x8x128xf32>
      %c0_52 = arith.constant 0 : index
      %c0_53 = arith.constant 0 : index
      %c0_54 = arith.constant 0 : index
      %65 = vector.load %arg6[%c0_52, %c0_53, %c0_54] : memref<1x8x128xf32, #tpu.memory_space<vmem>>, vector<1x8x128xf32>
      tpu.vector_store %arg6[%c0_52, %c0_53, %c0_54], %64 {strides = array<i32>} : memref<1x8x128xf32, #tpu.memory_space<vmem>>, vector<1x8x128xf32>,
      %cst_55 = arith.constant 0.000000e+00 : f32
      %66 = vector.broadcast %cst_55 : f32 to vector<1x8x128xf32>
      %c0_56 = arith.constant 0 : index
      %c0_57 = arith.constant 0 : index
      %c0_58 = arith.constant 0 : index
      %67 = vector.load %arg7[%c0_56, %c0_57, %c0_58] : memref<1x8x128xf32, #tpu.memory_space<vmem>>, vector<1x8x128xf32>
      tpu.vector_store %arg7[%c0_56, %c0_57, %c0_58], %66 {strides = array<i32>} : memref<1x8x128xf32, #tpu.memory_space<vmem>>, vector<1x8x128xf32>,
    } else {
    }
    %cst = arith.constant 0.000000e+00 : f32
    %3 = vector.broadcast %cst : f32 to vector<8x128xf32>
    %cst_1 = arith.constant 0.000000e+00 : f32
    %4 = vector.broadcast %cst_1 : f32 to vector<8x128xf32>
    %cst_2 = arith.constant 0.000000e+00 : f32
    %5 = vector.broadcast %cst_2 : f32 to vector<8x128xf32>
    %cst_3 = arith.constant 0.000000e+00 : f32
    %6 = vector.broadcast %cst_3 : f32 to vector<8x128xf32>
    %c0 = arith.constant 0 : index
    %c0_4 = arith.constant 0 : index
    %c0_5 = arith.constant 0 : index
    %7 = vector.load %arg2[%c0, %c0_4, %c0_5] : memref<1x8x128xf32, #tpu.memory_space<vmem>>, vector<1x8x128xf32>
    %8 = vector.shape_cast %7 : vector<1x8x128xf32> to vector<8x128xf32>
    %c0_6 = arith.constant 0 : index
    %c0_7 = arith.constant 0 : index
    %c0_8 = arith.constant 0 : index
    %9 = vector.load %arg3[%c0_6, %c0_7, %c0_8] : memref<1x8x128xf32, #tpu.memory_space<vmem>>, vector<1x8x128xf32>
    %10 = vector.shape_cast %9 : vector<1x8x128xf32> to vector<8x128xf32>
    %11 = math.absf %8 : vector<8x128xf32>
    %cst_9 = arith.constant 0.000000e+00 : f32
    %12 = vector.broadcast %cst_9 : f32 to vector<8x128xf32>
    %13 = arith.subf %12, %11 : vector<8x128xf32>
    %14 = math.exp %13 : vector<8x128xf32>
    %cst_10 = arith.constant 1.000000e+00 : f32
    %15 = vector.broadcast %cst_10 : f32 to vector<8x128xf32>
    %16 = arith.addf %15, %14 : vector<8x128xf32>
    %17 = tpu.reciprocal %16 {approx = true} : vector<8x128xf32> -> vector<8x128xf32>
    %cst_11 = arith.constant 0.000000e+00 : f32
    %18 = vector.broadcast %cst_11 : f32 to vector<8x128xf32>
    %19 = arith.cmpf oge, %8, %18 : vector<8x128xf32>
    %cst_12 = arith.constant 1.000000e+00 : f32
    %20 = vector.broadcast %cst_12 : f32 to vector<8x128xf32>
    %21 = arith.select %19, %20, %14 : vector<8x128xi1>, vector<8x128xf32>
    %22 = arith.mulf %21, %17 : vector<8x128xf32>
    %cst_13 = arith.constant 0.000000e+00 : f32
    %23 = vector.broadcast %cst_13 : f32 to vector<8x128xf32>
    %24 = arith.maximumf %8, %23 : vector<8x128xf32>
    %25 = arith.mulf %8, %10 : vector<8x128xf32>
    %26 = arith.subf %24, %25 : vector<8x128xf32>
    %cst_14 = arith.constant 1.000000e+00 : f32
    %27 = vector.broadcast %cst_14 : f32 to vector<8x128xf32>
    %28 = arith.addf %27, %14 : vector<8x128xf32>
    %29 = math.log %28 : vector<8x128xf32>
    %30 = arith.addf %26, %29 : vector<8x128xf32>
    %31 = vector.shape_cast %30 : vector<8x128xf32> to vector<1x8x128xf32>
    %cst_15 = arith.constant dense<0.000000e+00> : vector<8x128xf32>
    %32 = vector.multi_reduction <add>, %31, %cst_15 [0] : vector<1x8x128xf32> to vector<8x128xf32>
    %33 = arith.addf %3, %32 : vector<8x128xf32>
    %34 = arith.mulf %22, %10 : vector<8x128xf32>
    %35 = vector.shape_cast %34 : vector<8x128xf32> to vector<1x8x128xf32>
    %cst_16 = arith.constant dense<0.000000e+00> : vector<8x128xf32>
    %36 = vector.multi_reduction <add>, %35, %cst_16 [0] : vector<1x8x128xf32> to vector<8x128xf32>
    %37 = arith.addf %4, %36 : vector<8x128xf32>
    %38 = vector.shape_cast %22 : vector<8x128xf32> to vector<1x8x128xf32>
    %cst_17 = arith.constant dense<0.000000e+00> : vector<8x128xf32>
    %39 = vector.multi_reduction <add>, %38, %cst_17 [0] : vector<1x8x128xf32> to vector<8x128xf32>
    %40 = arith.addf %5, %39 : vector<8x128xf32>
    %41 = vector.shape_cast %10 : vector<8x128xf32> to vector<1x8x128xf32>
    %cst_18 = arith.constant dense<0.000000e+00> : vector<8x128xf32>
    %42 = vector.multi_reduction <add>, %41, %cst_18 [0] : vector<1x8x128xf32> to vector<8x128xf32>
    %43 = arith.addf %6, %42 : vector<8x128xf32>
    %c0_19 = arith.constant 0 : index
    %c0_20 = arith.constant 0 : index
    %c0_21 = arith.constant 0 : index
    %44 = vector.load %arg4[%c0_19, %c0_20, %c0_21] : memref<1x8x128xf32, #tpu.memory_space<vmem>>, vector<1x8x128xf32>
    %45 = vector.shape_cast %33 : vector<8x128xf32> to vector<1x8x128xf32>
    %46 = arith.addf %44, %45 : vector<1x8x128xf32>
    %c0_22 = arith.constant 0 : index
    %c0_23 = arith.constant 0 : index
    %c0_24 = arith.constant 0 : index
    %47 = vector.load %arg4[%c0_22, %c0_23, %c0_24] : memref<1x8x128xf32, #tpu.memory_space<vmem>>, vector<1x8x128xf32>
    tpu.vector_store %arg4[%c0_22, %c0_23, %c0_24], %46 {strides = array<i32>} : memref<1x8x128xf32, #tpu.memory_space<vmem>>, vector<1x8x128xf32>,
    %c0_25 = arith.constant 0 : index
    %c0_26 = arith.constant 0 : index
    %c0_27 = arith.constant 0 : index
    %48 = vector.load %arg5[%c0_25, %c0_26, %c0_27] : memref<1x8x128xf32, #tpu.memory_space<vmem>>, vector<1x8x128xf32>
    %49 = vector.shape_cast %37 : vector<8x128xf32> to vector<1x8x128xf32>
    %50 = arith.addf %48, %49 : vector<1x8x128xf32>
    %c0_28 = arith.constant 0 : index
    %c0_29 = arith.constant 0 : index
    %c0_30 = arith.constant 0 : index
    %51 = vector.load %arg5[%c0_28, %c0_29, %c0_30] : memref<1x8x128xf32, #tpu.memory_space<vmem>>, vector<1x8x128xf32>
    tpu.vector_store %arg5[%c0_28, %c0_29, %c0_30], %50 {strides = array<i32>} : memref<1x8x128xf32, #tpu.memory_space<vmem>>, vector<1x8x128xf32>,
    %c0_31 = arith.constant 0 : index
    %c0_32 = arith.constant 0 : index
    %c0_33 = arith.constant 0 : index
    %52 = vector.load %arg6[%c0_31, %c0_32, %c0_33] : memref<1x8x128xf32, #tpu.memory_space<vmem>>, vector<1x8x128xf32>
    %53 = vector.shape_cast %40 : vector<8x128xf32> to vector<1x8x128xf32>
    %54 = arith.addf %52, %53 : vector<1x8x128xf32>
    %c0_34 = arith.constant 0 : index
    %c0_35 = arith.constant 0 : index
    %c0_36 = arith.constant 0 : index
    %55 = vector.load %arg6[%c0_34, %c0_35, %c0_36] : memref<1x8x128xf32, #tpu.memory_space<vmem>>, vector<1x8x128xf32>
    tpu.vector_store %arg6[%c0_34, %c0_35, %c0_36], %54 {strides = array<i32>} : memref<1x8x128xf32, #tpu.memory_space<vmem>>, vector<1x8x128xf32>,
    %c0_37 = arith.constant 0 : index
    %c0_38 = arith.constant 0 : index
    %c0_39 = arith.constant 0 : index
    %56 = vector.load %arg7[%c0_37, %c0_38, %c0_39] : memref<1x8x128xf32, #tpu.memory_space<vmem>>, vector<1x8x128xf32>
    %57 = vector.shape_cast %43 : vector<8x128xf32> to vector<1x8x128xf32>
    %58 = arith.addf %56, %57 : vector<1x8x128xf32>
    %c0_40 = arith.constant 0 : index
    %c0_41 = arith.constant 0 : index
    %c0_42 = arith.constant 0 : index
    %59 = vector.load %arg7[%c0_40, %c0_41, %c0_42] : memref<1x8x128xf32, #tpu.memory_space<vmem>>, vector<1x8x128xf32>
    tpu.vector_store %arg7[%c0_40, %c0_41, %c0_42], %58 {strides = array<i32>} : memref<1x8x128xf32, #tpu.memory_space<vmem>>, vector<1x8x128xf32>,
    return
  }
  func.func @transform_0(%arg0: i32, %arg1: i32) -> (i32, i32, i32) {
    %c0_i32 = arith.constant 0 : i32
    %0 = arith.minsi %arg1, %c0_i32 : i32
    %c0_i32_0 = arith.constant 0 : i32
    %c0_i32_1 = arith.constant 0 : i32
    return %arg0, %0, %c0_i32_0 : i32, i32, i32
  }
  func.func @transform_1(%arg0: i32, %arg1: i32) -> (i32, i32, i32) {
    %c0_i32 = arith.constant 0 : i32
    %0 = arith.minsi %arg1, %c0_i32 : i32
    %c0_i32_0 = arith.constant 0 : i32
    %c0_i32_1 = arith.constant 0 : i32
    return %arg0, %0, %c0_i32_0 : i32, i32, i32
  }
  func.func @transform_2(%arg0: i32, %arg1: i32) -> (i32, i32, i32) {
    %c0_i32 = arith.constant 0 : i32
    %c0_i32_0 = arith.constant 0 : i32
    %c0_i32_1 = arith.constant 0 : i32
    return %arg0, %c0_i32, %c0_i32_0 : i32, i32, i32
  }
  func.func @transform_3(%arg0: i32, %arg1: i32) -> (i32, i32, i32) {
    %c0_i32 = arith.constant 0 : i32
    %c0_i32_0 = arith.constant 0 : i32
    %c0_i32_1 = arith.constant 0 : i32
    return %arg0, %c0_i32, %c0_i32_0 : i32, i32, i32
  }
  func.func @transform_4(%arg0: i32, %arg1: i32) -> (i32, i32, i32) {
    %c0_i32 = arith.constant 0 : i32
    %c0_i32_0 = arith.constant 0 : i32
    %c0_i32_1 = arith.constant 0 : i32
    return %arg0, %c0_i32, %c0_i32_0 : i32, i32, i32
  }
  func.func @transform_5(%arg0: i32, %arg1: i32) -> (i32, i32, i32) {
    %c0_i32 = arith.constant 0 : i32
    %c0_i32_0 = arith.constant 0 : i32
    %c0_i32_1 = arith.constant 0 : i32
    return %arg0, %c0_i32, %c0_i32_0 : i32, i32, i32
  }
}

</mosaic_0001>

<llo_original>
// kernel: tpu_custom_call.1
$region0: #{tpu_custom_call.1}
  #allocation0 [shape = 'u32[]', space=smem, size = 0x4, offset = 0x4, fixed_abs, tag = 'smem constant byte address 0x4 - core index']
  #allocation1 [shape = 'u32[72,128]{1,0:T(1,128)}', space=vmem, size = 0x9000, scoped, tag = 'internal scratch']
  %s0 = inlined_call_operand.hbm [shape: f32[2,8,128], index: 0, kind: input, shape index: {}]
  %s1 = inlined_call_operand.hbm [shape: f32[2,8,128], index: 1, kind: input, shape index: {}]
  %s2 = inlined_call_operand.hbm [shape: f32[2,8,128], index: 2, kind: output, shape index: {0}]
  %s3 = inlined_call_operand.hbm [shape: f32[2,8,128], index: 3, kind: output, shape index: {1}]
  %s4 = inlined_call_operand.hbm [shape: f32[2,8,128], index: 4, kind: output, shape index: {2}]
  %s5 = inlined_call_operand.hbm [shape: f32[2,8,128], index: 5, kind: output, shape index: {3}]
  %6 = xla_tuple %s2, %s3, %s4, %s5
  %s7 = sld [smem:[#allocation0]]
  $region77: #{tpu_custom_call.1} parent=0
    _
  %s9 = ssub.s32 1, %s7
  %s10 = scalar_select 0, %s9, %s7
  $region1: #{tpu_custom_call.1} parent=0
    #allocation2 [shape = 'u8[8192]{0}', space=vmem, size = 0x2000, scoped, tag = 'input window, operand 0']
    #allocation3 [shape = 's32[2]{0}', space=sflag, size = 0x8, scoped, tag = 'scoped memory for tpu_custom_call.1']
    #allocation4 [shape = 's32[2]{0}', space=sflag, size = 0x8, scoped, tag = 'scoped memory for tpu_custom_call.1']
    #allocation5 [shape = 'u8[8192]{0}', space=vmem, size = 0x2000, scoped, tag = 'input window, operand 1']
    #allocation6 [shape = 's32[2]{0}', space=sflag, size = 0x8, scoped, tag = 'scoped memory for tpu_custom_call.1']
    #allocation7 [shape = 'u8[8192]{0}', space=vmem, size = 0x2000, scoped, tag = 'output window, operand 0']
    #allocation8 [shape = 'u8[8192]{0}', space=vmem, size = 0x2000, scoped, tag = 'output window, operand 1']
    #allocation9 [shape = 's32[2]{0}', space=sflag, size = 0x8, scoped, tag = 'scoped memory for tpu_custom_call.1']
    #allocation10 [shape = 'u8[8192]{0}', space=vmem, size = 0x2000, scoped, tag = 'output window, operand 2']
    #allocation11 [shape = 'u8[8192]{0}', space=vmem, size = 0x2000, scoped, tag = 'output window, operand 3']
    #allocation12 [shape = 's32[2]{0}', space=sflag, size = 0x8, scoped, tag = 'scoped memory for tpu_custom_call.1']
    %11 = vsyncpa [#allocation3], 0
    %s12 = scalar_lea.sflag [#allocation3], 1
    %13 = vsyncpa %s12, 0
    %14 = vsyncpa [#allocation6], 0
    %s15 = scalar_lea.sflag [#allocation6], 1
    %16 = vsyncpa %s15, 0
    %17 = vsyncpa [#allocation4], 0
    %s18 = scalar_lea.sflag [#allocation4], 1
    %19 = vsyncpa %s18, 0
    %20 = vsyncpa [#allocation9], 0
    %s21 = scalar_lea.sflag [#allocation9], 1
    %22 = vsyncpa %s21, 0
    %23 = vsyncpa [#allocation12], 0
    %s24 = scalar_lea.sflag [#allocation12], 1
    %25 = vsyncpa %s24, 0
    loop: start=0, step=1, limit=4
    $region2: #{tpu_custom_call.1} parent=1 // loop_pre_header
      _
    $region3: #{tpu_custom_call.1} parent=1 // loop_header
      %s27 = sphi 0, %s31
      %p28 = scmp.ge.s32.totalorder %s27, 4
      %s34 = sphi 0, %s46
      %s35 = sphi 0, %s42
      %s36 = sphi 0, %s34
      %s37 = sphi 0, %s35
      %s38 = sphi 0, %s36
      %s39 = sphi 0, %s37
      %s55 = sphi 0, %s57
      %s58 = sphi 0, %s55
      %s59 = sphi 0, %s58
      %s75 = sphi 0, %s59
      %s87 = sphi 0, %s89
      %s90 = sphi 0, %s87
      %s91 = sphi 0, %s90
      %s107 = sphi 0, %s91
      %s113 = sphi 0, %s115
      %s116 = sphi 0, %s113
      %s117 = sphi 0, %s116
      %s133 = sphi 0, %s117
      %s139 = sphi 0, %s141
      %s142 = sphi 0, %s139
      %s143 = sphi 0, %s142
      %s159 = sphi 0, %s143
      %s165 = sphi 0, %s167
      %s168 = sphi 0, %s165
      %s169 = sphi 0, %s168
      %s185 = sphi 0, %s169
      %s191 = sphi 0, %s193
      %s194 = sphi 0, %s191
      %s195 = sphi 0, %s194
      %s211 = sphi 0, %s195
    $region4: #{tpu_custom_call.1} parent=1 // loop_header_branch
      %30 = sbr.rel (%p28) target = $region8
    $region5: #{tpu_custom_call.1} parent=1 // loop_body
      %s32 = ssub.s32 %s27, 1
      %s33 = ssub.s32 %s27, 2
      %s40 = sadd.s32 1, %s35
      %p41 = scmp.ge.s32.totalorder %s40, 1
      %s42 = scalar_select %p41, 0, %s40
      %s43 = sadd.s32 1, %s34
      %s44 = scalar_select %p41, %s43, %s34
      %p45 = scmp.ge.s32.totalorder %s44, 2
      %s46 = scalar_select %p45, 0, %s44
      %p47 = scmp.lt.s32.totalorder %s35, 0
      %s48 = scalar_select %p47, %s35, 0
      %p49 = scmp.lt.s32.totalorder %s42, 0
      %s50 = scalar_select %p49, %s42, 0
      %s51 = ssub.s32 %s34, %s46
      %s52 = ssub.s32 %s48, %s50
      %s53 = sor.u32 %s51, %s52
      %p54 = scmp.eq.s32.totalorder %s53, 0
      %s56 = sadd.s32 %s55, 1
      %s57 = scalar_select %p54, %s55, %s56
      %p60 = pneg %p54
      %p61 = scmp.eq.s32.totalorder %s27, 1
      %p62 = por %p60, %p61
      %p63 = scmp.ne.s32.totalorder %s55, %s58
      %p64 = scmp.eq.s32.totalorder %s27, 0
      %p65 = por %p63, %p64
      %p66 = scmp.ne.s32.totalorder %s55, %s58
      %p67 = scmp.eq.s32.totalorder %s32, 1
      %p68 = por %p66, %p67
      %p69 = scmp.ne.s32.totalorder %s58, %s59
      %p70 = scmp.eq.s32.totalorder %s32, 0
      %p71 = por %p69, %p70
      %p72 = scmp.ne.s32.totalorder %s58, %s59
      %p73 = scmp.eq.s32.totalorder %s33, 1
      %p74 = por %p72, %p73
      %p76 = scmp.ne.s32.totalorder %s59, %s75
      %p77 = scmp.eq.s32.totalorder %s33, 0
      %p78 = por %p76, %p77
      %p79 = scmp.lt.s32.totalorder %s35, 0
      %s80 = scalar_select %p79, %s35, 0
      %p81 = scmp.lt.s32.totalorder %s42, 0
      %s82 = scalar_select %p81, %s42, 0
      %s83 = ssub.s32 %s34, %s46
      %s84 = ssub.s32 %s80, %s82
      %s85 = sor.u32 %s83, %s84
      %p86 = scmp.eq.s32.totalorder %s85, 0
      %s88 = sadd.s32 %s87, 1
      %s89 = scalar_select %p86, %s87, %s88
      %p92 = pneg %p86
      %p93 = scmp.eq.s32.totalorder %s27, 1
      %p94 = por %p92, %p93
      %p95 = scmp.ne.s32.totalorder %s87, %s90
      %p96 = scmp.eq.s32.totalorder %s27, 0
      %p97 = por %p95, %p96
      %p98 = scmp.ne.s32.totalorder %s87, %s90
      %p99 = scmp.eq.s32.totalorder %s32, 1
      %p100 = por %p98, %p99
      %p101 = scmp.ne.s32.totalorder %s90, %s91
      %p102 = scmp.eq.s32.totalorder %s32, 0
      %p103 = por %p101, %p102
      %p104 = scmp.ne.s32.totalorder %s90, %s91
      %p105 = scmp.eq.s32.totalorder %s33, 1
      %p106 = por %p104, %p105
      %p108 = scmp.ne.s32.totalorder %s91, %s107
      %p109 = scmp.eq.s32.totalorder %s33, 0
      %p110 = por %p108, %p109
      %s111 = ssub.s32 %s34, %s46
      %p112 = scmp.eq.s32.totalorder %s111, 0
      %s114 = sadd.s32 %s113, 1
      %s115 = scalar_select %p112, %s113, %s114
      %p118 = pneg %p112
      %p119 = scmp.eq.s32.totalorder %s27, 1
      %p120 = por %p118, %p119
      %p121 = scmp.ne.s32.totalorder %s113, %s116
      %p122 = scmp.eq.s32.totalorder %s27, 0
      %p123 = por %p121, %p122
      %p124 = scmp.ne.s32.totalorder %s113, %s116
      %p125 = scmp.eq.s32.totalorder %s32, 1
      %p126 = por %p124, %p125
      %p127 = scmp.ne.s32.totalorder %s116, %s117
      %p128 = scmp.eq.s32.totalorder %s32, 0
      %p129 = por %p127, %p128
      %p130 = scmp.ne.s32.totalorder %s116, %s117
      %p131 = scmp.eq.s32.totalorder %s33, 1
      %p132 = por %p130, %p131
      %p134 = scmp.ne.s32.totalorder %s117, %s133
      %p135 = scmp.eq.s32.totalorder %s33, 0
      %p136 = por %p134, %p135
      %s137 = ssub.s32 %s34, %s46
      %p138 = scmp.eq.s32.totalorder %s137, 0
      %s140 = sadd.s32 %s139, 1
      %s141 = scalar_select %p138, %s139, %s140
      %p144 = pneg %p138
      %p145 = scmp.eq.s32.totalorder %s27, 1
      %p146 = por %p144, %p145
      %p147 = scmp.ne.s32.totalorder %s139, %s142
      %p148 = scmp.eq.s32.totalorder %s27, 0
      %p149 = por %p147, %p148
      %p150 = scmp.ne.s32.totalorder %s139, %s142
      %p151 = scmp.eq.s32.totalorder %s32, 1
      %p152 = por %p150, %p151
      %p153 = scmp.ne.s32.totalorder %s142, %s143
      %p154 = scmp.eq.s32.totalorder %s32, 0
      %p155 = por %p153, %p154
      %p156 = scmp.ne.s32.totalorder %s142, %s143
      %p157 = scmp.eq.s32.totalorder %s33, 1
      %p158 = por %p156, %p157
      %p160 = scmp.ne.s32.totalorder %s143, %s159
      %p161 = scmp.eq.s32.totalorder %s33, 0
      %p162 = por %p160, %p161
      %s163 = ssub.s32 %s34, %s46
      %p164 = scmp.eq.s32.totalorder %s163, 0
      %s166 = sadd.s32 %s165, 1
      %s167 = scalar_select %p164, %s165, %s166
      %p170 = pneg %p164
      %p171 = scmp.eq.s32.totalorder %s27, 1
      %p172 = por %p170, %p171
      %p173 = scmp.ne.s32.totalorder %s165, %s168
      %p174 = scmp.eq.s32.totalorder %s27, 0
      %p175 = por %p173, %p174
      %p176 = scmp.ne.s32.totalorder %s165, %s168
      %p177 = scmp.eq.s32.totalorder %s32, 1
      %p178 = por %p176, %p177
      %p179 = scmp.ne.s32.totalorder %s168, %s169
      %p180 = scmp.eq.s32.totalorder %s32, 0
      %p181 = por %p179, %p180
      %p182 = scmp.ne.s32.totalorder %s168, %s169
      %p183 = scmp.eq.s32.totalorder %s33, 1
      %p184 = por %p182, %p183
      %p186 = scmp.ne.s32.totalorder %s169, %s185
      %p187 = scmp.eq.s32.totalorder %s33, 0
      %p188 = por %p186, %p187
      %s189 = ssub.s32 %s34, %s46
      %p190 = scmp.eq.s32.totalorder %s189, 0
      %s192 = sadd.s32 %s191, 1
      %s193 = scalar_select %p190, %s191, %s192
      %p196 = pneg %p190
      %p197 = scmp.eq.s32.totalorder %s27, 1
      %p198 = por %p196, %p197
      %p199 = scmp.ne.s32.totalorder %s191, %s194
      %p200 = scmp.eq.s32.totalorder %s27, 0
      %p201 = por %p199, %p200
      %p202 = scmp.ne.s32.totalorder %s191, %s194
      %p203 = scmp.eq.s32.totalorder %s32, 1
      %p204 = por %p202, %p203
      %p205 = scmp.ne.s32.totalorder %s194, %s195
      %p206 = scmp.eq.s32.totalorder %s32, 0
      %p207 = por %p205, %p206
      %p208 = scmp.ne.s32.totalorder %s194, %s195
      %p209 = scmp.eq.s32.totalorder %s33, 1
      %p210 = por %p208, %p209
      %p212 = scmp.ne.s32.totalorder %s195, %s211
      %p213 = scmp.eq.s32.totalorder %s33, 0
      %p214 = por %p212, %p213
      %p215 = scmp.le.s32.totalorder 1, %s27
      %p216 = scmp.lt.s32.totalorder %s27, 3
      %p217 = pnand %p215, %p216
      %p218 = pneg %p217
      // Predicated region
      $region9: #{tpu_custom_call.1} parent=5 // pred_check
        _
      $region10: #{tpu_custom_call.1} parent=5 // pred_check_branch
        %220 = sbr.rel (%p217) target = $region12
      $region11: #{tpu_custom_call.1} parent=5 // pred_region
        %s221 = ssub.s32 %s27, 1
      $region12: #{tpu_custom_call.1} parent=5 // pred_fallthru
        _
      %p222 = scmp.lt.s32.totalorder %s27, 2
      // Predicated region
      $region13: #{tpu_custom_call.1} parent=5 // pred_check
        %p223 = pneg %p222
      $region14: #{tpu_custom_call.1} parent=5 // pred_check_branch
        %225 = sbr.rel (%p223) target = $region16
      $region15: #{tpu_custom_call.1} parent=5 // pred_region
        // Predicated region
        $region17: #{tpu_custom_call.1} parent=15 // pred_check
          %p226 = pneg %p65
        $region18: #{tpu_custom_call.1} parent=15 // pred_check_branch
          %228 = sbr.rel (%p226) target = $region20
        $region19: #{tpu_custom_call.1} parent=15 // pred_region
          %s229 = sand.u32 %s55, 1
          %s230 = scalar_lea.sflag [#allocation3], %s229
          %s231 = sand.u32 %s55, 1
          %s232 = smul.addr %s231, 8
          %s233 = scalar_lea.vmem [#allocation2], %s232
          %p234 = scmp.lt.s32.totalorder %s35, 0
          %s235 = scalar_select %p234, %s35, 0
          %237 = vsyncadd %s230, 0
          %s238 = sadd.s32 %s235, %s34
          %s239 = smul.addr %s238, 8
          %s240 = scalar_lea.hbm %s0, %s239
          %s242 = sshll.u32 %s240, 4
          %s243 = int_to_ptr.hbm [resolvable:$true] %s242
          %s244 = sshll.u32 %s233, 4
          %s245 = int_to_ptr.vmem [resolvable:$true] %s244
          %247 = dma.hbm_to_vmem [thread:$0]  %s243, 128, %s245, %s230
        $region20: #{tpu_custom_call.1} parent=15 // pred_fallthru
          _
        // Predicated region
        $region21: #{tpu_custom_call.1} parent=15 // pred_check
          %p248 = pneg %p97
        $region22: #{tpu_custom_call.1} parent=15 // pred_check_branch
          %250 = sbr.rel (%p248) target = $region24
        $region23: #{tpu_custom_call.1} parent=15 // pred_region
          %s251 = sand.u32 %s87, 1
          %s252 = scalar_lea.sflag [#allocation6], %s251
          %s253 = sand.u32 %s87, 1
          %s254 = smul.addr %s253, 8
          %s255 = scalar_lea.vmem [#allocation5], %s254
          %p256 = scmp.lt.s32.totalorder %s35, 0
          %s257 = scalar_select %p256, %s35, 0
          %259 = vsyncadd %s252, 0
          %s260 = sadd.s32 %s257, %s34
          %s261 = smul.addr %s260, 8
          %s262 = scalar_lea.hbm %s1, %s261
          %s264 = sshll.u32 %s262, 4
          %s265 = int_to_ptr.hbm [resolvable:$true] %s264
          %s266 = sshll.u32 %s255, 4
          %s267 = int_to_ptr.vmem [resolvable:$true] %s266
          %269 = dma.hbm_to_vmem [thread:$0]  %s265, 128, %s267, %s252
        $region24: #{tpu_custom_call.1} parent=15 // pred_fallthru
          _
      $region16: #{tpu_custom_call.1} parent=5 // pred_fallthru
        _
      %p270 = scmp.le.s32.totalorder 1, %s27
      %p271 = scmp.lt.s32.totalorder %s27, 3
      %p272 = pnand %p270, %p271
      %p273 = pneg %p272
      // Predicated region
      $region25: #{tpu_custom_call.1} parent=5 // pred_check
        _
      $region26: #{tpu_custom_call.1} parent=5 // pred_check_branch
        %275 = sbr.rel (%p272) target = $region28
      $region27: #{tpu_custom_call.1} parent=5 // pred_region
        %s276 = ssub.s32 %s27, 1
        %s277 = sand.u32 %s58, 1
        %s278 = scalar_lea.sflag [#allocation3], %s277
        %s279 = sand.u32 %s58, 1
        %s280 = smul.addr %s279, 8
        %s281 = scalar_lea.vmem [#allocation2], %s280
        // Predicated region
        $region29: #{tpu_custom_call.1} parent=27 // pred_check
          %p282 = pneg %p71
        $region30: #{tpu_custom_call.1} parent=27 // pred_check_branch
          %284 = sbr.rel (%p282) target = $region32
        $region31: #{tpu_custom_call.1} parent=27 // pred_region
          %286 = dma.done %s278, 128
        $region32: #{tpu_custom_call.1} parent=27 // pred_fallthru
          _
        %s287 = sand.u32 %s90, 1
        %s288 = scalar_lea.sflag [#allocation6], %s287
        %s289 = sand.u32 %s90, 1
        %s290 = smul.addr %s289, 8
        %s291 = scalar_lea.vmem [#allocation5], %s290
        // Predicated region
        $region33: #{tpu_custom_call.1} parent=27 // pred_check
          %p292 = pneg %p103
        $region34: #{tpu_custom_call.1} parent=27 // pred_check_branch
          %294 = sbr.rel (%p292) target = $region36
        $region35: #{tpu_custom_call.1} parent=27 // pred_region
          %296 = dma.done %s288, 128
        $region36: #{tpu_custom_call.1} parent=27 // pred_fallthru
          _
        %s297 = sand.u32 %s58, 1
        %s298 = scalar_lea.sflag [#allocation3], %s297
        %s299 = sand.u32 %s58, 1
        %s300 = smul.addr %s299, 8
        %s301 = scalar_lea.vmem [#allocation2], %s300
        %p302 = pneg %p71
        %p303 = pneg %p68
        %s304 = sand.u32 %s90, 1
        %s305 = scalar_lea.sflag [#allocation6], %s304
        %s306 = sand.u32 %s90, 1
        %s307 = smul.addr %s306, 8
        %s308 = scalar_lea.vmem [#allocation5], %s307
        %p309 = pneg %p103
        %p310 = pneg %p100
        %p311 = pneg %p129
        %p312 = pneg %p126
        %s313 = sand.u32 %s116, 1
        %s314 = scalar_lea.sflag [#allocation4], %s313
        %s315 = sand.u32 %s116, 1
        %s316 = smul.addr %s315, 8
        %s317 = scalar_lea.vmem [#allocation7], %s316
        %p318 = pneg %p155
        %p319 = pneg %p152
        %s320 = sand.u32 %s32, 1
        %s321 = scalar_lea.sflag [#allocation9], %s320
        %s322 = sand.u32 %s142, 1
        %s323 = smul.addr %s322, 8
        %s324 = scalar_lea.vmem [#allocation8], %s323
        %p325 = pneg %p181
        %p326 = pneg %p178
        %s327 = sand.u32 %s32, 1
        %s328 = scalar_lea.sflag [#allocation9], %s327
        %s329 = sand.u32 %s168, 1
        %s330 = smul.addr %s329, 8
        %s331 = scalar_lea.vmem [#allocation10], %s330
        %p332 = pneg %p207
        %p333 = pneg %p204
        %s334 = sand.u32 %s194, 1
        %s335 = scalar_lea.sflag [#allocation12], %s334
        %s336 = sand.u32 %s194, 1
        %s337 = smul.addr %s336, 8
        %s338 = scalar_lea.vmem [#allocation11], %s337
        %p339 = scmp.lt.s32.totalorder %s37, 0
        %s340 = scalar_select %p339, %s37, 0
        %p341 = scmp.lt.s32.totalorder %s37, 0
        %s342 = scalar_select %p341, %s37, 0
        %p343 = scmp.eq.s32.totalorder %s37, 0
        // Predicated region
        $region37: #{tpu_custom_call.1} parent=27 // pred_check
          %p344 = pneg %p343
        $region38: #{tpu_custom_call.1} parent=27 // pred_check_branch
          %346 = sbr.rel (%p344) target = $region40
        $region39: #{tpu_custom_call.1} parent=27 // pred_region
          %347 = vst [vmem:[%s317] sm:$0xff] 0.0
          %348 = vst [vmem:[%s324] sm:$0xff] 0.0
          %349 = vst [vmem:[%s331] sm:$0xff] 0.0
          %350 = vst [vmem:[%s338] sm:$0xff] 0.0
        $region40: #{tpu_custom_call.1} parent=27 // pred_fallthru
          _
        %v351 = vld [vmem:[%s281] sm:$0xff]
        %v352 = vld [vmem:[%s291] sm:$0xff]
        %v353 = vand.u32 2147483647, %v351
        %v354 = vsub.f32 0.0, %v353
        %v355 = vmul.f32 %v354, 1.442695
        %v356 = vpow.pop %v355
        %v357 = vadd.f32 %v356, 1.0
        %v358 = vrcp.pop %v357
        %vm359 = vcmp.ge.f32.partialorder %v351, 0.0
        %v360 = vsel %vm359, 1.0, %v356
        %v361 = vmul.f32 %v360, %v358
        %v362 = vmax.f32 %v351, 0.0
        %v363 = vmul.f32 %v351, %v352
        %v364 = vsub.f32 %v362, %v363
        %v365 = vlog2.pop %v357
        %v366 = vmul.f32 %v365, 0.6931472
        %v367 = vadd.f32 %v364, %v366
        %v368 = vadd.f32 %v367, 0.0
        %v369 = vadd.f32 %v368, 0.0
        %v370 = vmul.f32 %v361, %v352
        %v371 = vadd.f32 %v370, 0.0
        %v372 = vadd.f32 %v371, 0.0
        %v373 = vadd.f32 %v361, 0.0
        %v374 = vadd.f32 %v373, 0.0
        %v375 = vadd.f32 %v352, 0.0
        %v376 = vadd.f32 %v375, 0.0
        %v377 = vld [vmem:[%s317] sm:$0xff]
        %v378 = vadd.f32 %v377, %v369
        %379 = vst [vmem:[%s317] sm:$0xff] %v378
        %v380 = vld [vmem:[%s324] sm:$0xff]
        %v381 = vadd.f32 %v380, %v372
        %382 = vst [vmem:[%s324] sm:$0xff] %v381
        %v383 = vld [vmem:[%s331] sm:$0xff]
        %v384 = vadd.f32 %v383, %v374
        %385 = vst [vmem:[%s331] sm:$0xff] %v384
        %v386 = vld [vmem:[%s338] sm:$0xff]
        %v387 = vadd.f32 %v386, %v376
        %388 = vst [vmem:[%s338] sm:$0xff] %v387
        %s389 = sand.u32 %s116, 1
        %s390 = scalar_lea.sflag [#allocation4], %s389
        %s391 = sand.u32 %s116, 1
        %s392 = smul.addr %s391, 8
        %s393 = scalar_lea.vmem [#allocation7], %s392
        %s394 = sand.u32 %s32, 1
        %s395 = scalar_lea.sflag [#allocation9], %s394
        %s396 = sand.u32 %s142, 1
        %s397 = smul.addr %s396, 8
        %s398 = scalar_lea.vmem [#allocation8], %s397
        %s399 = sand.u32 %s32, 1
        %s400 = scalar_lea.sflag [#allocation9], %s399
        %s401 = sand.u32 %s168, 1
        %s402 = smul.addr %s401, 8
        %s403 = scalar_lea.vmem [#allocation10], %s402
        %s404 = sand.u32 %s194, 1
        %s405 = scalar_lea.sflag [#allocation12], %s404
        %s406 = sand.u32 %s194, 1
        %s407 = smul.addr %s406, 8
        %s408 = scalar_lea.vmem [#allocation11], %s407
        // Predicated region
        $region41: #{tpu_custom_call.1} parent=27 // pred_check
          %p409 = pneg %p126
        $region42: #{tpu_custom_call.1} parent=27 // pred_check_branch
          %411 = sbr.rel (%p409) target = $region44
        $region43: #{tpu_custom_call.1} parent=27 // pred_region
          %413 = vsyncadd %s390, 0
          %s414 = smul.addr %s36, 8
          %s415 = scalar_lea.hbm %s2, %s414
          %s417 = sshll.u32 %s393, 4
          %s418 = int_to_ptr.vmem [resolvable:$true] %s417
          %s419 = sshll.u32 %s415, 4
          %s420 = int_to_ptr.hbm [resolvable:$true] %s419
          %422 = dma.vmem_to_hbm [thread:$0]  %s418, 128, %s420, %s390
        $region44: #{tpu_custom_call.1} parent=27 // pred_fallthru
          _
        // Predicated region
        $region45: #{tpu_custom_call.1} parent=27 // pred_check
          %p423 = pneg %p152
        $region46: #{tpu_custom_call.1} parent=27 // pred_check_branch
          %425 = sbr.rel (%p423) target = $region48
        $region47: #{tpu_custom_call.1} parent=27 // pred_region
          %427 = vsyncadd %s395, 0
          %s428 = smul.addr %s36, 8
          %s429 = scalar_lea.hbm %s3, %s428
          %s431 = sshll.u32 %s398, 4
          %s432 = int_to_ptr.vmem [resolvable:$true] %s431
          %s433 = sshll.u32 %s429, 4
          %s434 = int_to_ptr.hbm [resolvable:$true] %s433
          %436 = dma.vmem_to_hbm [thread:$0]  %s432, 128, %s434, %s395
        $region48: #{tpu_custom_call.1} parent=27 // pred_fallthru
          _
        // Predicated region
        $region49: #{tpu_custom_call.1} parent=27 // pred_check
          %p437 = pneg %p178
        $region50: #{tpu_custom_call.1} parent=27 // pred_check_branch
          %439 = sbr.rel (%p437) target = $region52
        $region51: #{tpu_custom_call.1} parent=27 // pred_region
          %441 = vsyncadd %s400, 0
          %s442 = smul.addr %s36, 8
          %s443 = scalar_lea.hbm %s4, %s442
          %s445 = sshll.u32 %s403, 4
          %s446 = int_to_ptr.vmem [resolvable:$true] %s445
          %s447 = sshll.u32 %s443, 4
          %s448 = int_to_ptr.hbm [resolvable:$true] %s447
          %450 = dma.vmem_to_hbm [thread:$0]  %s446, 128, %s448, %s400
        $region52: #{tpu_custom_call.1} parent=27 // pred_fallthru
          _
        // Predicated region
        $region53: #{tpu_custom_call.1} parent=27 // pred_check
          %p451 = pneg %p204
        $region54: #{tpu_custom_call.1} parent=27 // pred_check_branch
          %453 = sbr.rel (%p451) target = $region56
        $region55: #{tpu_custom_call.1} parent=27 // pred_region
          %455 = vsyncadd %s405, 0
          %s456 = smul.addr %s36, 8
          %s457 = scalar_lea.hbm %s5, %s456
          %s459 = sshll.u32 %s408, 4
          %s460 = int_to_ptr.vmem [resolvable:$true] %s459
          %s461 = sshll.u32 %s457, 4
          %s462 = int_to_ptr.hbm [resolvable:$true] %s461
          %464 = dma.vmem_to_hbm [thread:$0]  %s460, 128, %s462, %s405
        $region56: #{tpu_custom_call.1} parent=27 // pred_fallthru
          _
      $region28: #{tpu_custom_call.1} parent=5 // pred_fallthru
        _
      %p465 = scmp.le.s32.totalorder 2, %s27
      // Predicated region
      $region57: #{tpu_custom_call.1} parent=5 // pred_check
        %p466 = pneg %p465
      $region58: #{tpu_custom_call.1} parent=5 // pred_check_branch
        %468 = sbr.rel (%p466) target = $region60
      $region59: #{tpu_custom_call.1} parent=5 // pred_region
        %s469 = ssub.s32 %s27, 2
        // Predicated region
        $region61: #{tpu_custom_call.1} parent=59 // pred_check
          %p470 = pneg %p132
        $region62: #{tpu_custom_call.1} parent=59 // pred_check_branch
          %472 = sbr.rel (%p470) target = $region64
        $region63: #{tpu_custom_call.1} parent=59 // pred_region
          %s473 = sand.u32 %s117, 1
          %s474 = scalar_lea.sflag [#allocation4], %s473
          %s475 = sand.u32 %s117, 1
          %s476 = smul.addr %s475, 8
          %s477 = scalar_lea.vmem [#allocation7], %s476
          %479 = dma.done %s474, 128
        $region64: #{tpu_custom_call.1} parent=59 // pred_fallthru
          _
        // Predicated region
        $region65: #{tpu_custom_call.1} parent=59 // pred_check
          %p480 = pneg %p158
        $region66: #{tpu_custom_call.1} parent=59 // pred_check_branch
          %482 = sbr.rel (%p480) target = $region68
        $region67: #{tpu_custom_call.1} parent=59 // pred_region
          %s483 = sand.u32 %s33, 1
          %s484 = scalar_lea.sflag [#allocation9], %s483
          %s485 = sand.u32 %s143, 1
          %s486 = smul.addr %s485, 8
          %s487 = scalar_lea.vmem [#allocation8], %s486
          %489 = dma.done %s484, 128
        $region68: #{tpu_custom_call.1} parent=59 // pred_fallthru
          _
        // Predicated region
        $region69: #{tpu_custom_call.1} parent=59 // pred_check
          %p490 = pneg %p184
        $region70: #{tpu_custom_call.1} parent=59 // pred_check_branch
          %492 = sbr.rel (%p490) target = $region72
        $region71: #{tpu_custom_call.1} parent=59 // pred_region
          %s493 = sand.u32 %s33, 1
          %s494 = scalar_lea.sflag [#allocation9], %s493
          %s495 = sand.u32 %s169, 1
          %s496 = smul.addr %s495, 8
          %s497 = scalar_lea.vmem [#allocation10], %s496
          %499 = dma.done %s494, 128
        $region72: #{tpu_custom_call.1} parent=59 // pred_fallthru
          _
        // Predicated region
        $region73: #{tpu_custom_call.1} parent=59 // pred_check
          %p500 = pneg %p210
        $region74: #{tpu_custom_call.1} parent=59 // pred_check_branch
          %502 = sbr.rel (%p500) target = $region76
        $region75: #{tpu_custom_call.1} parent=59 // pred_region
          %s503 = sand.u32 %s195, 1
          %s504 = scalar_lea.sflag [#allocation12], %s503
          %s505 = sand.u32 %s195, 1
          %s506 = smul.addr %s505, 8
          %s507 = scalar_lea.vmem [#allocation11], %s506
          %509 = dma.done %s504, 128
        $region76: #{tpu_custom_call.1} parent=59 // pred_fallthru
          _
      $region60: #{tpu_custom_call.1} parent=5 // pred_fallthru
        _
    $region6: #{tpu_custom_call.1} parent=1 // loop_footer
      %s31 = sadd.s32 1, %s27
    $region7: #{tpu_custom_call.1} parent=1 // loop_footer_branch
      %26 = sbr.rel target = $region3
    $region8: #{tpu_custom_call.1} parent=1 // loop_exit
      _
    %510 = vsyncpa [#allocation3], 1
    %s511 = scalar_lea.sflag [#allocation3], 1
    %512 = vsyncpa %s511, 1
    %513 = vsyncpa [#allocation6], 1
    %s514 = scalar_lea.sflag [#allocation6], 1
    %515 = vsyncpa %s514, 1
    %516 = vsyncpa [#allocation4], 1
    %s517 = scalar_lea.sflag [#allocation4], 1
    %518 = vsyncpa %s517, 1
    %519 = vsyncpa [#allocation9], 1
    %s520 = scalar_lea.sflag [#allocation9], 1
    %521 = vsyncpa %s520, 1
    %522 = vsyncpa [#allocation12], 1
    %s523 = scalar_lea.sflag [#allocation12], 1
    %524 = vsyncpa %s523, 1

</llo_original>
